<compile_context>
chip_gen: v5e
topology: v5e:2x2
jax: 0.10.0
libtpu: 0.0.40
codegen_flags: <defaults>
</compile_context>

<pallas_src>
import jax
import jax.numpy as jnp
from jax.experimental import pallas as pl
from jax.experimental.pallas import tpu as pltpu


# ------------------------------ tiling knobs ---------------------------------
ONEHOT_ROW_TILE = 128       # rows of one-hot fed to the MXU per grid step
                            # (matches v5e MXU; bounds vreg pressure with the
                            # 512-lane vocab chunk on v6e/v7x as well)
ONEHOT_VOCAB_CHUNK = 512    # lanes of vocab processed per MXU push
ONEHOT_MAX_VOCAB = 1024     # crossover on V: one-hot only for small vocabs
GATHER_ROW_TILE = 128       # rows DMA-gathered per grid step (>= 32 so bf16/
                            # int8 tables also satisfy min sublane tiling)


def _round_up(x: int, m: int) -> int:
    return (x + m - 1) // m * m


# --------------------- path A: one-hot matmul (small vocab) -------------------
def _embed_onehot_kernel(ids_ref, table_ref, out_ref):
    # ids_ref:   (ROW_TILE, 1) int32
    # table_ref: (V, Dp)       f32 (resident; only used when V <= ONEHOT_MAX_VOCAB)
    # out_ref:   (ROW_TILE, Dp) lane-dense output slab (Dp % 128 == 0)
    ids = ids_ref[...]                                   # (RT, 1)
    rt = ids.shape[0]
    v, dp = table_ref.shape
    acc = jnp.zeros((rt, dp), jnp.float32)
    # Static Python loop over vocab chunks (V static and small): keeps the
    # one-hot tile to (RT, <=512) instead of (RT, V), avoiding vreg spills.
    for c0 in range(0, v, ONEHOT_VOCAB_CHUNK):
        width = min(ONEHOT_VOCAB_CHUNK, v - c0)
        lane = jax.lax.broadcasted_iota(jnp.int32, (rt, width), 1) + c0
        onehot = (ids == lane).astype(table_ref.dtype)   # exact 0/1 in f32
        acc = acc + jnp.dot(onehot, table_ref[pl.ds(c0, width), :],
                            preferred_element_type=jnp.float32)
    out_ref[...] = acc.astype(out_ref.dtype)


def _embedding_onehot_impl(ids: jax.Array, table: jax.Array) -> jax.Array:
    lead_shape = ids.shape
    v, d = table.shape
    dp = _round_up(d, 128)                  # lane-dense output (unmasked stores)
    if dp != d:
        table = jnp.pad(table, ((0, 0), (0, dp - d)))
    ids_flat = ids.reshape(-1).astype(jnp.int32)
    n = ids_flat.shape[0]
    r = _round_up(max(n, 1), ONEHOT_ROW_TILE)
    ids_p = jnp.pad(ids_flat, (0, r - n)) if r != n else ids_flat
    ids2d = ids_p.reshape(r, 1)
    itemsize = table.dtype.itemsize
    out = pl.pallas_call(
        _embed_onehot_kernel,
        out_shape=jax.ShapeDtypeStruct((r, dp), table.dtype),
        grid_spec=pltpu.PrefetchScalarGridSpec(
            num_scalar_prefetch=0,
            grid=(r // ONEHOT_ROW_TILE,),
            in_specs=[
                pl.BlockSpec((ONEHOT_ROW_TILE, 1), lambda t: (t, 0)),   # id rows
                pl.BlockSpec((v, dp), lambda t: (0, 0)),                # table
            ],
            out_specs=pl.BlockSpec((ONEHOT_ROW_TILE, dp), lambda t: (t, 0)),
        ),
        compiler_params=pltpu.CompilerParams(
            dimension_semantics=("parallel",),
            # With V <= 1024 the (double-buffered) resident table is at most a
            # few MiB, so the 32 MiB scoped limit is plenty on all chips
            # (incl. v7x's 64 MiB physical VMEM).
            vmem_limit_bytes=32 * 1024 * 1024),
        cost_estimate=pl.CostEstimate(
            flops=2 * r * v * dp,
            transcendentals=0,
            bytes_accessed=r * 4 + v * dp * itemsize + r * dp * itemsize),
    )(ids2d, table)
    return out[:n, :d].reshape(*lead_shape, d)


# ---------------- path B: DMA row gather (table stays in HBM) -----------------
def _embed_gather_kernel(ids_ref, table_ref, out_ref, gbuf, sems):
    # ids_ref:   (R,) int32 in SMEM (scalar prefetch)
    # table_ref: (V, Dp) in HBM (memory_space=pl.ANY)
    # out_ref:   (GATHER_ROW_TILE, Dp) VMEM output block
    # gbuf:      (2 * GATHER_ROW_TILE, Dp) VMEM double buffer (slot-major)
    # sems:      (2,) DMA semaphores, one shared semaphore per slot
    t = pl.program_id(0)
    nsteps = pl.num_programs(0)
    slot = jax.lax.rem(t, 2)

    def issue_rows(step, slot_):
        base = step * GATHER_ROW_TILE
        row0 = slot_ * GATHER_ROW_TILE
        def body(r, carry):
            rid = ids_ref[base + r]
            pltpu.make_async_copy(
                table_ref.at[pl.ds(rid, 1), :],
                gbuf.at[pl.ds(row0 + r, 1), :],
                sems.at[slot_]).start()
            return carry
        jax.lax.fori_loop(0, GATHER_ROW_TILE, body, None, unroll=8)

    def wait_rows(step, slot_):
        base = step * GATHER_ROW_TILE
        row0 = slot_ * GATHER_ROW_TILE
        def body(r, carry):
            # Rebuild the descriptor with the *same* row id as the started
            # copy so start/wait pairs stay consistent (no fake source row).
            rid = ids_ref[base + r]
            pltpu.make_async_copy(
                table_ref.at[pl.ds(rid, 1), :],
                gbuf.at[pl.ds(row0 + r, 1), :],
                sems.at[slot_]).wait()
            return carry
        jax.lax.fori_loop(0, GATHER_ROW_TILE, body, None, unroll=8)

    # Prime the pipeline on the first grid step.
    @pl.when(t == 0)
    def _():
        issue_rows(0, 0)

    # Prefetch the next step's rows into the other slot *before* waiting on
    # this step's slot, so DMA latency hides behind this step's drain + store.
    @pl.when(t + 1 < nsteps)
    def _():
        issue_rows(t + 1, 1 - slot)

    wait_rows(t, slot)
    row0 = pl.multiple_of(slot * GATHER_ROW_TILE, GATHER_ROW_TILE)
    out_ref[...] = gbuf[pl.ds(row0, GATHER_ROW_TILE), :]


def _embedding_gather_impl(ids: jax.Array, table: jax.Array) -> jax.Array:
    lead_shape = ids.shape
    v, d = table.shape
    dp = _round_up(d, 128)
    if dp != d:
        # TODO(synk): for very large tables, hoist this pad to table creation
        # time instead of paying an O(V*Dp) copy per call.
        table = jnp.pad(table, ((0, 0), (0, dp - d)))
    ids_flat = ids.reshape(-1).astype(jnp.int32)
    n = ids_flat.shape[0]
    r = _round_up(max(n, 1), GATHER_ROW_TILE)
    ids_p = jnp.pad(ids_flat, (0, r - n)) if r != n else ids_flat
    itemsize = table.dtype.itemsize
    out = pl.pallas_call(
        _embed_gather_kernel,
        out_shape=jax.ShapeDtypeStruct((r, dp), table.dtype),
        grid_spec=pltpu.PrefetchScalarGridSpec(
            num_scalar_prefetch=1,                           # ids -> SMEM
            grid=(r // GATHER_ROW_TILE,),
            in_specs=[pl.BlockSpec(memory_space=pl.ANY)],    # table stays in HBM
            out_specs=pl.BlockSpec((GATHER_ROW_TILE, dp), lambda t, ids: (t, 0)),
            scratch_shapes=[
                pltpu.VMEM((2 * GATHER_ROW_TILE, dp), table.dtype),
                pltpu.SemaphoreType.DMA((2,)),
            ],
        ),
        compiler_params=pltpu.CompilerParams(
            # Cross-step DMA prefetch carries state in scratch -> iterations
            # are NOT independent; must be sequential ("arbitrary").
            dimension_semantics=("arbitrary",),
            vmem_limit_bytes=32 * 1024 * 1024),
        cost_estimate=pl.CostEstimate(
            flops=0,
            transcendentals=0,
            bytes_accessed=r * 4 + 2 * r * dp * itemsize),
    )(ids_p, table)
    return out[:n, :d].reshape(*lead_shape, d)


# jit per (shape, dtype) so host-side pad/reshape glue is compiled & cached.
_embedding_onehot = jax.jit(_embedding_onehot_impl)
_embedding_gather = jax.jit(_embedding_gather_impl)


# ------------------------------ dispatcher ------------------------------------
def embedding_lookup(ids: jax.Array, table: jax.Array,
                     method: str = "auto") -> jax.Array:
    """ids: (...,) int, table: (V, D) -> (..., D)."""
    if method == "auto":
        # Gate the crossover on V: one-hot cost per output row scales with V
        # (VPU compares + MXU K=V) while the gather path's HBM traffic is
        # V-independent, so one-hot only pays off for small vocabularies.
        method = "onehot" if table.shape[0] <= ONEHOT_MAX_VOCAB else "gather"
    if method == "onehot":
        return _embedding_onehot(ids, table)
    if method == "gather":
        return _embedding_gather(ids, table)
    raise ValueError(f"unknown method {method!r}")


# --------------------------- TokenTensorizer ----------------------------------
class TokenTensorizer:
    def __init__(self, num_embeddings: int, embedding_dim: int, max_len: int,
                 pretrain_path=None, seed: int = 0):
        self.num_embeddings = num_embeddings
        self.embedding_dim = embedding_dim
        self.max_len = max_len
        self.pretrain_path = pretrain_path
        # torch.nn.Embedding default init: N(0, 1); vocab size = num_embeddings + 1
        # (extra row is the padding token == num_embeddings).
        key = jax.random.PRNGKey(seed)
        self.table = jax.random.normal(
            key, (num_embeddings + 1, embedding_dim), dtype=jnp.float32)
        # TODO(synk): scale_grad_by_freq is backward-pass-only; no forward equivalent.

    def padding(self, data, padding_number):
        text_processed, label_processed = [], []
        for string in data["text"]:
            s = list(string)[: self.max_len]
            s = s + [padding_number] * (self.max_len - len(s))
            text_processed.append(s)
        for label in data["label"]:
            l = list(label)[: self.max_len]
            l = l + [-1] * (self.max_len - len(l))
            label_processed.append(l)
        return text_processed, label_processed

    def forward(self, data):
        text, label = self.padding(data, self.num_embeddings)
        text = jnp.asarray(text, dtype=jnp.int32)       # (B, max_len)
        label = jnp.asarray(label, dtype=jnp.int32)     # (B, max_len)
        text_embedding = embedding_lookup(text, self.table)
        return text_embedding, label


# ------------------------------- main ------------------------------------------
if __name__ == "__main__":
    num_embeddings = 16     # vocab (pad id == 16, table has 17 rows)
    embedding_dim = 32
    max_len = 8
    batch = 2

    tensorizer = TokenTensorizer(num_embeddings, embedding_dim, max_len, seed=0)

    # Deterministic synthetic "DataSource" output: ragged token/label lists.
    key = jax.random.PRNGKey(0)
    k1, k2 = jax.random.split(key)
    row0 = jax.random.randint(k1, (5,), 0, num_embeddings).tolist()   # shorter
    row1 = jax.random.randint(k2, (11,), 0, num_embeddings).tolist()  # longer
    data = {
        "text": [row0, row1],
        "label": [[1, 0, 1, 0, 1], [0, 1, 0, 1, 0, 1, 0, 1, 0, 1, 0]],
    }

    text_embedding, label = tensorizer.forward(data)
    text_embedding = jax.block_until_ready(text_embedding)
    label = jax.block_until_ready(label)

    # Reference check for the (small-vocab) one-hot path.
    ids_pad, _ = tensorizer.padding(data, num_embeddings)
    ids_pad = jnp.asarray(ids_pad, dtype=jnp.int32)
    ref = jnp.take(tensorizer.table, ids_pad, axis=0)
    assert text_embedding.shape == (batch, max_len, embedding_dim)
    assert label.shape == (batch, max_len)
    assert jnp.allclose(text_embedding, ref, atol=1e-5), "onehot path mismatch"

    # Smoke-test the large-vocab DMA-gather path against a plain gather.
    kg = jax.random.PRNGKey(1)
    kt, ki = jax.random.split(kg)
    big_table = jax.random.normal(kt, (1024, 256), dtype=jnp.float32)
    big_ids = jax.random.randint(ki, (4, 8), 0, 1024, dtype=jnp.int32)
    gathered = embedding_lookup(big_ids, big_table, method="gather")
    gathered = jax.block_until_ready(gathered)
    ref2 = jnp.take(big_table, big_ids, axis=0)
    assert gathered.shape == (4, 8, 256)
    assert jnp.allclose(gathered, ref2, atol=1e-6), "gather path mismatch"

    print("KERNEL_OK")
</pallas_src>

<mosaic_0001>
module attributes {stable_mosaic.version = 11 : i64} {
  func.func @_embed_onehot_kernel(%arg0: i32, %arg1: memref<128x1xi32, #tpu.memory_space<vmem>>, %arg2: memref<17x128xf32, #tpu.memory_space<vmem>>, %arg3: memref<128x128xf32, #tpu.memory_space<vmem>>) attributes {dimension_semantics = [#tpu.dimension_semantics<parallel>], iteration_bounds = array<i64: 1>, scalar_prefetch = 0 : i64, scratch_operands = 0 : i64, tpu.core_type = #tpu.core_type<tc>, window_params = [{transform_indices = @transform_0, window_bounds = array<i64: 128, 1>}, {pipeline_mode = #tpu.pipeline_mode<synchronous>, transform_indices = @transform_1, window_bounds = array<i64: 17, 128>}, {transform_indices = @transform_2, window_bounds = array<i64: 128, 128>}]} {
    %c0 = arith.constant 0 : index
    %c0_0 = arith.constant 0 : index
    %0 = vector.load %arg1[%c0, %c0_0] : memref<128x1xi32, #tpu.memory_space<vmem>>, vector<128x1xi32>
    %cst = arith.constant 0.000000e+00 : f32
    %1 = vector.broadcast %cst : f32 to vector<128x128xf32>
    %2 = tpu.iota {dimensions = array<i32: 1>} : vector<128x17xi32>
    %c0_i32 = arith.constant 0 : i32
    %3 = vector.broadcast %c0_i32 : i32 to vector<128x17xi32>
    %4 = arith.addi %2, %3 : vector<128x17xi32>
    %5 = vector.broadcast %0 : vector<128x1xi32> to vector<128x17xi32>
    %6 = arith.cmpi eq, %5, %4 : vector<128x17xi32>
    %7 = arith.extui %6 : vector<128x17xi1> to vector<128x17xi32>
    %8 = arith.sitofp %7 : vector<128x17xi32> to vector<128x17xf32>
    %c0_1 = arith.constant 0 : index
    %c0_2 = arith.constant 0 : index
    %9 = vector.load %arg2[%c0_1, %c0_2] : memref<17x128xf32, #tpu.memory_space<vmem>>, vector<17x128xf32>
    %cst_3 = arith.constant dense<0.000000e+00> : vector<128x128xf32>
    %10 = tpu.matmul %8, %9, %cst_3 {dimension_numbers = #tpu.dot_dimension_numbers<[1], [0], [0], [1], [0, 0, 1, 1], [], []>} : vector<128x17xf32>, vector<17x128xf32>, vector<128x128xf32> -> vector<128x128xf32>
    %11 = arith.addf %1, %10 : vector<128x128xf32>
    %c0_4 = arith.constant 0 : index
    %c0_5 = arith.constant 0 : index
    %12 = vector.load %arg3[%c0_4, %c0_5] : memref<128x128xf32, #tpu.memory_space<vmem>>, vector<128x128xf32>
    tpu.vector_store %arg3[%c0_4, %c0_5], %11 {strides = array<i32>} : memref<128x128xf32, #tpu.memory_space<vmem>>, vector<128x128xf32>,
    return
  }
  func.func @transform_0(%arg0: i32) -> (i32, i32) {
    %c0_i32 = arith.constant 0 : i32
    %c0_i32_0 = arith.constant 0 : i32
    return %arg0, %c0_i32 : i32, i32
  }
  func.func @transform_1(%arg0: i32) -> (i32, i32) {
    %c0_i32 = arith.constant 0 : i32
    %c0_i32_0 = arith.constant 0 : i32
    %c0_i32_1 = arith.constant 0 : i32
    return %c0_i32, %c0_i32_0 : i32, i32
  }
  func.func @transform_2(%arg0: i32) -> (i32, i32) {
    %c0_i32 = arith.constant 0 : i32
    %c0_i32_0 = arith.constant 0 : i32
    return %arg0, %c0_i32 : i32, i32
  }
}

</mosaic_0001>

<llo_original>
// kernel: _embedding_onehot_impl.1
$region0: #{_embedding_onehot_impl.1}
  #allocation0 [shape = 'u32[]', space=smem, size = 0x4, offset = 0x4, fixed_abs, tag = 'smem constant byte address 0x4 - core index']
  #allocation1 [shape = 'u32[72,128]{1,0:T(1,128)}', space=vmem, size = 0x9000, scoped, tag = 'internal scratch']
  %s0 = inlined_call_operand.vmem [shape: s32[128,1], index: 0, kind: input, shape index: {}]
  %s1 = inlined_call_operand.vmem [shape: f32[17,128], index: 1, kind: input, shape index: {}]
  %s2 = inlined_call_operand.vmem [shape: f32[128,128], index: 2, kind: output, shape index: {}]
  %s3 = sld [smem:[#allocation0]]
  $region18: #{_embedding_onehot_impl.1} parent=0
    _
  %s5 = ssub.s32 1, %s3
  %s6 = scalar_select 0, %s5, %s3
  // Predicated region
  $region2: #{_embedding_onehot_impl.1} parent=0 // pred_check
    _
  $region3: #{_embedding_onehot_impl.1} parent=0 // pred_check_branch
    %8 = sbr.rel (0) target = $region5
  $region4: #{_embedding_onehot_impl.1} parent=0 // pred_region
    _
  $region5: #{_embedding_onehot_impl.1} parent=0 // pred_fallthru
    _
  // Predicated region
  $region6: #{_embedding_onehot_impl.1} parent=0 // pred_check
    _
  $region7: #{_embedding_onehot_impl.1} parent=0 // pred_check_branch
    %10 = sbr.rel (0) target = $region9
  $region8: #{_embedding_onehot_impl.1} parent=0 // pred_region
    _
  $region9: #{_embedding_onehot_impl.1} parent=0 // pred_fallthru
    _
  %v11 = vld [vmem:[%s0] sm:$0xff]
  %v12 = vld [vmem:[%s0 + $0x8] sm:$0xff]
  %v13 = vld [vmem:[%s0 + $0x10] sm:$0xff]
  %v14 = vld [vmem:[%s0 + $0x18] sm:$0xff]
  %v15 = vld [vmem:[%s0 + $0x20] sm:$0xff]
  %v16 = vld [vmem:[%s0 + $0x28] sm:$0xff]
  %v17 = vld [vmem:[%s0 + $0x30] sm:$0xff]
  %v18 = vld [vmem:[%s0 + $0x38] sm:$0xff]
  %v19 = vld [vmem:[%s0 + $0x40] sm:$0xff]
  %v20 = vld [vmem:[%s0 + $0x48] sm:$0xff]
  %v21 = vld [vmem:[%s0 + $0x50] sm:$0xff]
  %v22 = vld [vmem:[%s0 + $0x58] sm:$0xff]
  %v23 = vld [vmem:[%s0 + $0x60] sm:$0xff]
  %v24 = vld [vmem:[%s0 + $0x68] sm:$0xff]
  %v25 = vld [vmem:[%s0 + $0x70] sm:$0xff]
  %v26 = vld [vmem:[%s0 + $0x78] sm:$0xff]
  %v27 = vlaneseq
  %v28 = vand.u32 %v27, 127
  %29 = vset.pattern.permute.xlu0 0
  %30 = vperm.xlu0 %29, %v11
  %v31 = vpop.permute.xlu0 %30
  %32 = vset.pattern.permute.xlu0 0
  %33 = vperm.xlu0 %32, %v12
  %v34 = vpop.permute.xlu0 %33
  %35 = vset.pattern.permute.xlu0 0
  %36 = vperm.xlu0 %35, %v13
  %v37 = vpop.permute.xlu0 %36
  %38 = vset.pattern.permute.xlu0 0
  %39 = vperm.xlu0 %38, %v14
  %v40 = vpop.permute.xlu0 %39
  %41 = vset.pattern.permute.xlu0 0
  %42 = vperm.xlu0 %41, %v15
  %v43 = vpop.permute.xlu0 %42
  %44 = vset.pattern.permute.xlu0 0
  %45 = vperm.xlu0 %44, %v16
  %v46 = vpop.permute.xlu0 %45
  %47 = vset.pattern.permute.xlu0 0
  %48 = vperm.xlu0 %47, %v17
  %v49 = vpop.permute.xlu0 %48
  %50 = vset.pattern.permute.xlu0 0
  %51 = vperm.xlu0 %50, %v18
  %v52 = vpop.permute.xlu0 %51
  %53 = vset.pattern.permute.xlu0 0
  %54 = vperm.xlu0 %53, %v19
  %v55 = vpop.permute.xlu0 %54
  %56 = vset.pattern.permute.xlu0 0
  %57 = vperm.xlu0 %56, %v20
  %v58 = vpop.permute.xlu0 %57
  %59 = vset.pattern.permute.xlu0 0
  %60 = vperm.xlu0 %59, %v21
  %v61 = vpop.permute.xlu0 %60
  %62 = vset.pattern.permute.xlu0 0
  %63 = vperm.xlu0 %62, %v22
  %v64 = vpop.permute.xlu0 %63
  %65 = vset.pattern.permute.xlu0 0
  %66 = vperm.xlu0 %65, %v23
  %v67 = vpop.permute.xlu0 %66
  %68 = vset.pattern.permute.xlu0 0
  %69 = vperm.xlu0 %68, %v24
  %v70 = vpop.permute.xlu0 %69
  %71 = vset.pattern.permute.xlu0 0
  %72 = vperm.xlu0 %71, %v25
  %v73 = vpop.permute.xlu0 %72
  %74 = vset.pattern.permute.xlu0 0
  %75 = vperm.xlu0 %74, %v26
  %v76 = vpop.permute.xlu0 %75
  %vm77 = vcmp.eq.s32.totalorder %v31, %v28
  %vm78 = vcmp.eq.s32.totalorder %v34, %v28
  %vm79 = vcmp.eq.s32.totalorder %v37, %v28
  %vm80 = vcmp.eq.s32.totalorder %v40, %v28
  %vm81 = vcmp.eq.s32.totalorder %v43, %v28
  %vm82 = vcmp.eq.s32.totalorder %v46, %v28
  %vm83 = vcmp.eq.s32.totalorder %v49, %v28
  %vm84 = vcmp.eq.s32.totalorder %v52, %v28
  %vm85 = vcmp.eq.s32.totalorder %v55, %v28
  %vm86 = vcmp.eq.s32.totalorder %v58, %v28
  %vm87 = vcmp.eq.s32.totalorder %v61, %v28
  %vm88 = vcmp.eq.s32.totalorder %v64, %v28
  %vm89 = vcmp.eq.s32.totalorder %v67, %v28
  %vm90 = vcmp.eq.s32.totalorder %v70, %v28
  %vm91 = vcmp.eq.s32.totalorder %v73, %v28
  %vm92 = vcmp.eq.s32.totalorder %v76, %v28
  %v93 = vsel %vm77, 1, 0
  %v94 = vsel %vm78, 1, 0
  %v95 = vsel %vm79, 1, 0
  %v96 = vsel %vm80, 1, 0
  %v97 = vsel %vm81, 1, 0
  %v98 = vsel %vm82, 1, 0
  %v99 = vsel %vm83, 1, 0
  %v100 = vsel %vm84, 1, 0
  %v101 = vsel %vm85, 1, 0
  %v102 = vsel %vm86, 1, 0
  %v103 = vsel %vm87, 1, 0
  %v104 = vsel %vm88, 1, 0
  %v105 = vsel %vm89, 1, 0
  %v106 = vsel %vm90, 1, 0
  %v107 = vsel %vm91, 1, 0
  %v108 = vsel %vm92, 1, 0
  %v109 = vcvt.s32.f32 %v93
  %v110 = vcvt.s32.f32 %v94
  %v111 = vcvt.s32.f32 %v95
  %v112 = vcvt.s32.f32 %v96
  %v113 = vcvt.s32.f32 %v97
  %v114 = vcvt.s32.f32 %v98
  %v115 = vcvt.s32.f32 %v99
  %v116 = vcvt.s32.f32 %v100
  %v117 = vcvt.s32.f32 %v101
  %v118 = vcvt.s32.f32 %v102
  %v119 = vcvt.s32.f32 %v103
  %v120 = vcvt.s32.f32 %v104
  %v121 = vcvt.s32.f32 %v105
  %v122 = vcvt.s32.f32 %v106
  %v123 = vcvt.s32.f32 %v107
  %v124 = vcvt.s32.f32 %v108
  %v125 = vld [vmem:[%s1] sm:$0xff]
  %v126 = vld [vmem:[%s1 + $0x8] sm:$0xff]
  %v127 = vld [vmem:[%s1 + $0x10] sm:$0x1]
  %vm128 = vcmask 138240
  %v130 = vsel %vm128, %v109, 0
  %v133 = vsel %vm128, %v110, 0
  %v136 = vsel %vm128, %v111, 0
  %v139 = vsel %vm128, %v112, 0
  %v142 = vsel %vm128, %v113, 0
  %v145 = vsel %vm128, %v114, 0
  %v148 = vsel %vm128, %v115, 0
  %v151 = vsel %vm128, %v116, 0
  %v154 = vsel %vm128, %v117, 0
  %v157 = vsel %vm128, %v118, 0
  %v160 = vsel %vm128, %v119, 0
  %v163 = vsel %vm128, %v120, 0
  %v166 = vsel %vm128, %v121, 0
  %v169 = vsel %vm128, %v122, 0
  %v172 = vsel %vm128, %v123, 0
  %v175 = vsel %vm128, %v124, 0
  %vm177 = vcmask 1040384
  %v179 = vsel %vm177, %v127, 0
  %181 = vmatpush.msra.mxu0 0.0
  %182 = vmatpush.msra.mxu0 0.0
  %183 = vmatpush.msra.mxu0 0.0
  %184 = vmatpush.msra.mxu0 0.0
  %185 = vmatpush.msra.mxu0 0.0
  %186 = vmatpush.msra.mxu0 0.0
  %187 = vmatpush.msra.mxu0 0.0
  %188 = vmatpush.msra.mxu0 0.0
  %189 = vmatpush.msra.mxu0 0.0
  %190 = vmatpush.msra.mxu0 0.0
  %191 = vmatpush.msra.mxu0 0.0
  %192 = vmatpush.msra.mxu0 0.0
  %193 = vmatpush.msra.mxu0 0.0
  %194 = vmatpush.msra.mxu0 %v179
  %195 = vmatpush.msra.mxu0 %v126
  %196 = vmatpush.msra.mxu0 %v125
  %197 = vmatmul.f32.gmra.mxu0 %v130
  %v198 = vpop.f32.mrf.mxu0
  %v199 = vadd.f32 0.0, %v198
  %200 = vmatmul.f32.gmra.mxu0 %v133
  %v201 = vpop.f32.mrf.mxu0
  %v202 = vadd.f32 0.0, %v201
  %203 = vmatmul.f32.gmra.mxu0 %v136
  %v204 = vpop.f32.mrf.mxu0
  %v205 = vadd.f32 0.0, %v204
  %206 = vmatmul.f32.gmra.mxu0 %v139
  %v207 = vpop.f32.mrf.mxu0
  %v208 = vadd.f32 0.0, %v207
  %209 = vmatmul.f32.gmra.mxu0 %v142
  %v210 = vpop.f32.mrf.mxu0
  %v211 = vadd.f32 0.0, %v210
  %212 = vmatmul.f32.gmra.mxu0 %v145
  %v213 = vpop.f32.mrf.mxu0
  %v214 = vadd.f32 0.0, %v213
  %215 = vmatmul.f32.gmra.mxu0 %v148
  %v216 = vpop.f32.mrf.mxu0
  %v217 = vadd.f32 0.0, %v216
  %218 = vmatmul.f32.gmra.mxu0 %v151
  %v219 = vpop.f32.mrf.mxu0
  %v220 = vadd.f32 0.0, %v219
  %221 = vmatmul.f32.gmra.mxu0 %v154
  %v222 = vpop.f32.mrf.mxu0
  %v223 = vadd.f32 0.0, %v222
  %224 = vmatmul.f32.gmra.mxu0 %v157
  %v225 = vpop.f32.mrf.mxu0
  %v226 = vadd.f32 0.0, %v225
  %227 = vmatmul.f32.gmra.mxu0 %v160
  %v228 = vpop.f32.mrf.mxu0
  %v229 = vadd.f32 0.0, %v228
  %230 = vmatmul.f32.gmra.mxu0 %v163
  %v231 = vpop.f32.mrf.mxu0
  %v232 = vadd.f32 0.0, %v231
  %233 = vmatmul.f32.gmra.mxu0 %v166
  %v234 = vpop.f32.mrf.mxu0
  %v235 = vadd.f32 0.0, %v234
  %236 = vmatmul.f32.gmra.mxu0 %v169
  %v237 = vpop.f32.mrf.mxu0
  %v238 = vadd.f32 0.0, %v237
  %239 = vmatmul.f32.gmra.mxu0 %v172
  %v240 = vpop.f32.mrf.mxu0
  %v241 = vadd.f32 0.0, %v240
  %242 = vmatmul.f32.gmra.mxu0 %v175
  %v243 = vpop.f32.mrf.mxu0
  %v244 = vadd.f32 0.0, %v243
  %245 = vdwg.mxu0
  %246 = vst [vmem:[%s2] sm:$0xff] %v199
  %247 = vst [vmem:[%s2 + $0x8] sm:$0xff] %v202
  %248 = vst [vmem:[%s2 + $0x10] sm:$0xff] %v205
  %249 = vst [vmem:[%s2 + $0x18] sm:$0xff] %v208
  %250 = vst [vmem:[%s2 + $0x20] sm:$0xff] %v211
  %251 = vst [vmem:[%s2 + $0x28] sm:$0xff] %v214
  %252 = vst [vmem:[%s2 + $0x30] sm:$0xff] %v217
  %253 = vst [vmem:[%s2 + $0x38] sm:$0xff] %v220
  %254 = vst [vmem:[%s2 + $0x40] sm:$0xff] %v223
  %255 = vst [vmem:[%s2 + $0x48] sm:$0xff] %v226
  %256 = vst [vmem:[%s2 + $0x50] sm:$0xff] %v229
  %257 = vst [vmem:[%s2 + $0x58] sm:$0xff] %v232
  %258 = vst [vmem:[%s2 + $0x60] sm:$0xff] %v235
  %259 = vst [vmem:[%s2 + $0x68] sm:$0xff] %v238
  %260 = vst [vmem:[%s2 + $0x70] sm:$0xff] %v241
  %261 = vst [vmem:[%s2 + $0x78] sm:$0xff] %v244
  // Predicated region
  $region10: #{_embedding_onehot_impl.1} parent=0 // pred_check
    _
  $region11: #{_embedding_onehot_impl.1} parent=0 // pred_check_branch
    %263 = sbr.rel (0) target = $region13
  $region12: #{_embedding_onehot_impl.1} parent=0 // pred_region
    _
  $region13: #{_embedding_onehot_impl.1} parent=0 // pred_fallthru
    _
  // Predicated region
  $region14: #{_embedding_onehot_impl.1} parent=0 // pred_check
    _
  $region15: #{_embedding_onehot_impl.1} parent=0 // pred_check_branch
    %265 = sbr.rel (0) target = $region17
  $region16: #{_embedding_onehot_impl.1} parent=0 // pred_region
    _
  $region17: #{_embedding_onehot_impl.1} parent=0 // pred_fallthru
    _

</llo_original>
